<compile_context>
chip_gen: v7x
topology: tpu7x:2x2x1
jax: 0.10.0
libtpu: 0.0.40
codegen_flags: <defaults>
</compile_context>

<pallas_src>
import math

import jax
import jax.numpy as jnp
from jax.experimental import pallas as pl
from jax.experimental.pallas import tpu as pltpu

LOG_SIG_MIN = -20.0
_LANE = 128
_SUBLANE = 8


def _round_up(n, m):
    return ((n + m - 1) // m) * m


def _skill_prior_kernel(x_ref, w1_ref, w23_ref, wm_ref, b_ref, o_ref):
    # MXU operands take the weights' dtype (bf16 by default, f32 optional); accumulation
    # is f32. Bias-add / ReLU stay in f32 on the VPU (v5e has no bf16 VALU path).
    cdt = w1_ref.dtype
    zd = wm_ref.shape[1]  # unpadded z_dim

    x = x_ref[...]
    h = jnp.maximum(
        jnp.dot(x.astype(cdt), w1_ref[...], preferred_element_type=jnp.float32)
        + b_ref[0:1, :], 0.0)
    h = jnp.maximum(
        jnp.dot(h.astype(cdt), w23_ref[0], preferred_element_type=jnp.float32)
        + b_ref[1:2, :], 0.0)
    h = jnp.maximum(
        jnp.dot(h.astype(cdt), w23_ref[1], preferred_element_type=jnp.float32)
        + b_ref[2:3, :], 0.0)
    mean = (jnp.dot(h.astype(cdt), wm_ref[...], preferred_element_type=jnp.float32)
            + b_ref[3:4, :zd])
    o_ref[...] = mean.astype(o_ref.dtype)


def init_skill_prior_params(key, obs_dim, z_dim, hidden_dim):
    """Deterministic PyTorch-Linear-style init; weights stored as [in, out]."""
    ks = iter(jax.random.split(key, 9))

    def lin(fan_in, fan_out):
        bound = 1.0 / math.sqrt(fan_in)
        w = jax.random.uniform(next(ks), (fan_in, fan_out), jnp.float32, -bound, bound)
        b = jax.random.uniform(next(ks), (fan_out,), jnp.float32, -bound, bound)
        return w, b

    w1, b1 = lin(obs_dim, hidden_dim)
    w2, b2 = lin(hidden_dim, hidden_dim)
    w3, b3 = lin(hidden_dim, hidden_dim)
    wm, bm = lin(hidden_dim, z_dim)
    log_std = jax.random.uniform(next(ks), (z_dim,), jnp.float32, -1.0, 1.0)
    return {"w1": w1, "b1": b1, "w2": w2, "b2": b2, "w3": w3, "b3": b3,
            "w_mean": wm, "b_mean": bm, "log_std": log_std}


def prepare_params(params, *, compute_dtype=jnp.bfloat16):
    """Pack weights for the kernel (done once, outside the hot path).

    * hidden_dim is zero-padded to a multiple of 128 lanes (exact: padded columns stay 0
      through ReLU and contribute 0 to later dots); obs_dim (layer-1 K) and z_dim
      (output N) are NOT padded.
    * W2/W3 are stacked into one (2, Hp, Hp) slab; the four biases into one (4, Hp) f32
      slab (mean bias occupies the first z_dim columns of row 3).
    * compute_dtype=bf16 (default) is safe on v5e/v6e/v7x: every MXU accepts bf16
      operands, accumulation is f32 in-kernel, and bias/ReLU run in f32 on the VPU.
      Pass compute_dtype=jnp.float32 for bit-tight comparisons against an f32 reference.
    """
    obs_dim, hidden = params["w1"].shape
    z_dim = params["w_mean"].shape[1]
    Hp = _round_up(hidden, _LANE)
    assert z_dim <= Hp, "bias slab assumes z_dim <= padded hidden_dim"

    def pad_w(w, tgt_in, tgt_out):
        fi, fo = w.shape
        return jnp.pad(w, ((0, tgt_in - fi), (0, tgt_out - fo))).astype(compute_dtype)

    w1 = pad_w(params["w1"], obs_dim, Hp)        # K unpadded
    w2 = pad_w(params["w2"], Hp, Hp)
    w3 = pad_w(params["w3"], Hp, Hp)
    wm = pad_w(params["w_mean"], Hp, z_dim)      # N unpadded

    def pad_b(b):
        return jnp.pad(b, (0, Hp - b.shape[0]))

    bias = jnp.stack([pad_b(params["b1"]), pad_b(params["b2"]),
                      pad_b(params["b3"]), pad_b(params["b_mean"])]).astype(jnp.float32)

    return {"w1": w1, "w23": jnp.stack([w2, w3], axis=0), "w_mean": wm, "bias": bias,
            "log_std": params["log_std"],
            "obs_dim": int(obs_dim), "z_dim": int(z_dim), "hidden_padded": int(Hp)}


def skill_prior_forward(obs, prepared, *, block_m=None):
    """Returns (mean, std) — stands in for torch.distributions.Normal(mean, std)."""
    B, D = obs.shape
    assert D == prepared["obs_dim"]
    z_dim = prepared["z_dim"]

    w1, w23, wm, bias = prepared["w1"], prepared["w23"], prepared["w_mean"], prepared["bias"]
    Hp = prepared["hidden_padded"]

    # Big sublane-aligned batch tiles (the kernel is step-overhead dominated); for large
    # batches keep >= 2 grid steps so both v7x TensorCores get work. Edge blocks handle
    # any remainder (partial rows are discarded on store).
    if block_m is None:
        if B >= 2048:
            block_m = 1024
        elif B >= 64:
            block_m = _round_up(pl.cdiv(B, 2), _SUBLANE)
        else:
            block_m = _round_up(max(B, 1), _SUBLANE)
    grid = (pl.cdiv(B, block_m),)

    flops = 2 * B * (D * Hp + 2 * Hp * Hp + Hp * z_dim)
    bytes_accessed = (B * D * 4
                      + sum(int(a.size) * a.dtype.itemsize for a in (w1, w23, wm, bias))
                      + B * z_dim * 4)

    mean = pl.pallas_call(
        _skill_prior_kernel,
        out_shape=jax.ShapeDtypeStruct((B, z_dim), jnp.float32),
        grid_spec=pltpu.PrefetchScalarGridSpec(
            num_scalar_prefetch=0,
            grid=grid,
            in_specs=[
                pl.BlockSpec((block_m, D), lambda i: (i, 0)),     # obs tile (pipelined over batch)
                pl.BlockSpec((D, Hp),      lambda i: (0, 0)),     # W1  (grid-invariant, unpadded K)
                pl.BlockSpec((2, Hp, Hp),  lambda i: (0, 0, 0)),  # W2/W3 slab (grid-invariant)
                pl.BlockSpec((Hp, z_dim),  lambda i: (0, 0)),     # mean W (grid-invariant, unpadded N)
                pl.BlockSpec((4, Hp),      lambda i: (0, 0)),     # bias slab (grid-invariant, f32)
            ],
            # Output written unpadded (B, z_dim); masked vst is far cheaper than 8x the
            # write bytes plus a post-kernel slice pass.
            out_specs=pl.BlockSpec((block_m, z_dim), lambda i: (i, 0)),
        ),
        compiler_params=pltpu.CompilerParams(
            dimension_semantics=("parallel",),
            vmem_limit_bytes=32 * 1024 * 1024,  # plenty on v5e/v6e/v7x; footprint is <3 MiB
        ),
        cost_estimate=pl.CostEstimate(flops=flops, transcendentals=0,
                                      bytes_accessed=bytes_accessed),
    )(obs.astype(jnp.float32), w1, w23, wm, bias)

    # TODO(synk): torch.distributions.Normal has no Pallas equivalent; we return (mean, std).
    std = jnp.exp(jnp.maximum(prepared["log_std"], LOG_SIG_MIN))
    return mean, std


def reference_forward(obs, params):
    h = jnp.maximum(obs @ params["w1"] + params["b1"], 0.0)
    h = jnp.maximum(h @ params["w2"] + params["b2"], 0.0)
    h = jnp.maximum(h @ params["w3"] + params["b3"], 0.0)
    mean = h @ params["w_mean"] + params["b_mean"]
    std = jnp.exp(jnp.maximum(params["log_std"], LOG_SIG_MIN))
    return mean, std


if __name__ == "__main__":
    # Small shapes consistent with the module: batch=16, obs_dim=32, hidden_dim=32, z_dim=16.
    B, obs_dim, z_dim, hidden_dim = 16, 32, 16, 32

    key = jax.random.PRNGKey(0)
    k_obs, k_p = jax.random.split(key)
    obs = jax.random.normal(k_obs, (B, obs_dim), jnp.float32)

    params = init_skill_prior_params(k_p, obs_dim, z_dim, hidden_dim)
    ref_mean, ref_std = reference_forward(obs, params)

    # 1) f32-weight path: exact check against the reference.
    prepared_f32 = prepare_params(params, compute_dtype=jnp.float32)
    mean_f32, std = skill_prior_forward(obs, prepared_f32)
    (mean_f32, std) = jax.block_until_ready((mean_f32, std))
    assert mean_f32.shape == (B, z_dim)
    assert std.shape == (z_dim,)
    assert jnp.allclose(mean_f32, ref_mean, atol=1e-5, rtol=1e-5), "f32 mean mismatch vs reference"
    assert jnp.allclose(std, ref_std, atol=1e-6, rtol=1e-6), "std mismatch vs reference"

    # 2) default bf16-weight path (the perf-recommended config): looser tolerance,
    #    expected bf16 precision tradeoff.
    prepared_bf16 = prepare_params(params)
    mean_bf16, _ = skill_prior_forward(obs, prepared_bf16)
    mean_bf16 = jax.block_until_ready(mean_bf16)
    assert mean_bf16.shape == (B, z_dim)
    assert jnp.allclose(mean_bf16, ref_mean, atol=5e-2, rtol=5e-2), "bf16 mean mismatch vs reference"

    print("KERNEL_OK")
</pallas_src>

<mosaic_0001>
module attributes {stable_mosaic.version = 11 : i64} {
  func.func @_skill_prior_kernel(%arg0: i32, %arg1: memref<16x32xf32, #tpu.memory_space<vmem>>, %arg2: memref<32x128xf32, #tpu.memory_space<vmem>>, %arg3: memref<2x128x128xf32, #tpu.memory_space<vmem>>, %arg4: memref<128x16xf32, #tpu.memory_space<vmem>>, %arg5: memref<4x128xf32, #tpu.memory_space<vmem>>, %arg6: memref<16x16xf32, #tpu.memory_space<vmem>>) attributes {dimension_semantics = [#tpu.dimension_semantics<parallel>], iteration_bounds = array<i64: 1>, scalar_prefetch = 0 : i64, scratch_operands = 0 : i64, tpu.core_type = #tpu.core_type<tc>, window_params = [{transform_indices = @transform_0, window_bounds = array<i64: 16, 32>}, {pipeline_mode = #tpu.pipeline_mode<synchronous>, transform_indices = @transform_1, window_bounds = array<i64: 32, 128>}, {pipeline_mode = #tpu.pipeline_mode<synchronous>, transform_indices = @transform_2, window_bounds = array<i64: 2, 128, 128>}, {pipeline_mode = #tpu.pipeline_mode<synchronous>, transform_indices = @transform_3, window_bounds = array<i64: 128, 16>}, {pipeline_mode = #tpu.pipeline_mode<synchronous>, transform_indices = @transform_4, window_bounds = array<i64: 4, 128>}, {transform_indices = @transform_5, window_bounds = array<i64: 16, 16>}]} {
    %c0 = arith.constant 0 : index
    %c0_0 = arith.constant 0 : index
    %0 = vector.load %arg1[%c0, %c0_0] : memref<16x32xf32, #tpu.memory_space<vmem>>, vector<16x32xf32>
    %c0_1 = arith.constant 0 : index
    %c0_2 = arith.constant 0 : index
    %1 = vector.load %arg2[%c0_1, %c0_2] : memref<32x128xf32, #tpu.memory_space<vmem>>, vector<32x128xf32>
    %cst = arith.constant dense<0.000000e+00> : vector<16x128xf32>
    %2 = tpu.matmul %0, %1, %cst {dimension_numbers = #tpu.dot_dimension_numbers<[1], [0], [0], [1], [0, 0, 1, 1], [], []>} : vector<16x32xf32>, vector<32x128xf32>, vector<16x128xf32> -> vector<16x128xf32>
    %c0_3 = arith.constant 0 : index
    %c0_4 = arith.constant 0 : index
    %3 = vector.load %arg5[%c0_3, %c0_4] : memref<4x128xf32, #tpu.memory_space<vmem>>, vector<1x128xf32>
    %4 = vector.broadcast %3 : vector<1x128xf32> to vector<16x128xf32>
    %5 = arith.addf %2, %4 : vector<16x128xf32>
    %cst_5 = arith.constant 0.000000e+00 : f32
    %6 = vector.broadcast %cst_5 : f32 to vector<16x128xf32>
    %7 = arith.maximumf %5, %6 : vector<16x128xf32>
    %c0_6 = arith.constant 0 : index
    %c0_7 = arith.constant 0 : index
    %c0_8 = arith.constant 0 : index
    %8 = vector.load %arg3[%c0_6, %c0_7, %c0_8] : memref<2x128x128xf32, #tpu.memory_space<vmem>>, vector<1x128x128xf32>
    %9 = vector.shape_cast %8 : vector<1x128x128xf32> to vector<128x128xf32>
    %cst_9 = arith.constant dense<0.000000e+00> : vector<16x128xf32>
    %10 = tpu.matmul %7, %9, %cst_9 {dimension_numbers = #tpu.dot_dimension_numbers<[1], [0], [0], [1], [0, 0, 1, 1], [], []>} : vector<16x128xf32>, vector<128x128xf32>, vector<16x128xf32> -> vector<16x128xf32>
    %c1 = arith.constant 1 : index
    %c0_10 = arith.constant 0 : index
    %11 = vector.load %arg5[%c1, %c0_10] : memref<4x128xf32, #tpu.memory_space<vmem>>, vector<1x128xf32>
    %12 = vector.broadcast %11 : vector<1x128xf32> to vector<16x128xf32>
    %13 = arith.addf %10, %12 : vector<16x128xf32>
    %cst_11 = arith.constant 0.000000e+00 : f32
    %14 = vector.broadcast %cst_11 : f32 to vector<16x128xf32>
    %15 = arith.maximumf %13, %14 : vector<16x128xf32>
    %c1_12 = arith.constant 1 : index
    %c0_13 = arith.constant 0 : index
    %c0_14 = arith.constant 0 : index
    %16 = vector.load %arg3[%c1_12, %c0_13, %c0_14] : memref<2x128x128xf32, #tpu.memory_space<vmem>>, vector<1x128x128xf32>
    %17 = vector.shape_cast %16 : vector<1x128x128xf32> to vector<128x128xf32>
    %cst_15 = arith.constant dense<0.000000e+00> : vector<16x128xf32>
    %18 = tpu.matmul %15, %17, %cst_15 {dimension_numbers = #tpu.dot_dimension_numbers<[1], [0], [0], [1], [0, 0, 1, 1], [], []>} : vector<16x128xf32>, vector<128x128xf32>, vector<16x128xf32> -> vector<16x128xf32>
    %c2 = arith.constant 2 : index
    %c0_16 = arith.constant 0 : index
    %19 = vector.load %arg5[%c2, %c0_16] : memref<4x128xf32, #tpu.memory_space<vmem>>, vector<1x128xf32>
    %20 = vector.broadcast %19 : vector<1x128xf32> to vector<16x128xf32>
    %21 = arith.addf %18, %20 : vector<16x128xf32>
    %cst_17 = arith.constant 0.000000e+00 : f32
    %22 = vector.broadcast %cst_17 : f32 to vector<16x128xf32>
    %23 = arith.maximumf %21, %22 : vector<16x128xf32>
    %c0_18 = arith.constant 0 : index
    %c0_19 = arith.constant 0 : index
    %24 = vector.load %arg4[%c0_18, %c0_19] : memref<128x16xf32, #tpu.memory_space<vmem>>, vector<128x16xf32>
    %cst_20 = arith.constant dense<0.000000e+00> : vector<16x16xf32>
    %25 = tpu.matmul %23, %24, %cst_20 {dimension_numbers = #tpu.dot_dimension_numbers<[1], [0], [0], [1], [0, 0, 1, 1], [], []>} : vector<16x128xf32>, vector<128x16xf32>, vector<16x16xf32> -> vector<16x16xf32>
    %c3 = arith.constant 3 : index
    %c0_21 = arith.constant 0 : index
    %26 = vector.load %arg5[%c3, %c0_21] : memref<4x128xf32, #tpu.memory_space<vmem>>, vector<1x16xf32>
    %27 = vector.broadcast %26 : vector<1x16xf32> to vector<16x16xf32>
    %28 = arith.addf %25, %27 : vector<16x16xf32>
    %c0_22 = arith.constant 0 : index
    %c0_23 = arith.constant 0 : index
    %29 = vector.load %arg6[%c0_22, %c0_23] : memref<16x16xf32, #tpu.memory_space<vmem>>, vector<16x16xf32>
    tpu.vector_store %arg6[%c0_22, %c0_23], %28 {strides = array<i32>} : memref<16x16xf32, #tpu.memory_space<vmem>>, vector<16x16xf32>,
    return
  }
  func.func @transform_0(%arg0: i32) -> (i32, i32) {
    %c0_i32 = arith.constant 0 : i32
    %c0_i32_0 = arith.constant 0 : i32
    return %arg0, %c0_i32 : i32, i32
  }
  func.func @transform_1(%arg0: i32) -> (i32, i32) {
    %c0_i32 = arith.constant 0 : i32
    %c0_i32_0 = arith.constant 0 : i32
    %c0_i32_1 = arith.constant 0 : i32
    return %c0_i32, %c0_i32_0 : i32, i32
  }
  func.func @transform_2(%arg0: i32) -> (i32, i32, i32) {
    %c0_i32 = arith.constant 0 : i32
    %c0_i32_0 = arith.constant 0 : i32
    %c0_i32_1 = arith.constant 0 : i32
    %c0_i32_2 = arith.constant 0 : i32
    return %c0_i32, %c0_i32_0, %c0_i32_1 : i32, i32, i32
  }
  func.func @transform_3(%arg0: i32) -> (i32, i32) {
    %c0_i32 = arith.constant 0 : i32
    %c0_i32_0 = arith.constant 0 : i32
    %c0_i32_1 = arith.constant 0 : i32
    return %c0_i32, %c0_i32_0 : i32, i32
  }
  func.func @transform_4(%arg0: i32) -> (i32, i32) {
    %c0_i32 = arith.constant 0 : i32
    %c0_i32_0 = arith.constant 0 : i32
    %c0_i32_1 = arith.constant 0 : i32
    return %c0_i32, %c0_i32_0 : i32, i32
  }
  func.func @transform_5(%arg0: i32) -> (i32, i32) {
    %c0_i32 = arith.constant 0 : i32
    %c0_i32_0 = arith.constant 0 : i32
    return %arg0, %c0_i32 : i32, i32
  }
}

</mosaic_0001>

<llo_original>
// kernel: tpu_custom_call.1
$region0: #{tpu_custom_call.1}
  #allocation0 [shape = 'u32[]', space=smem, size = 0x4, offset = 0x4, fixed_abs, tag = 'smem constant byte address 0x4 - core index']
  #allocation1 [shape = 'u32[144,128]{1,0:T(1,128)}', space=vmem, size = 0x12000, scoped, tag = 'internal scratch']
  %s0 = inlined_call_operand.vmem [shape: f32[16,32], index: 0, kind: input, shape index: {}]
  %s1 = inlined_call_operand.vmem [shape: f32[32,128], index: 1, kind: input, shape index: {}]
  %s2 = inlined_call_operand.hbm [shape: f32[2,128,128], index: 2, kind: input, shape index: {}]
  %s3 = inlined_call_operand.vmem [shape: f32[128,16], index: 3, kind: input, shape index: {}]
  %s4 = inlined_call_operand.vmem [shape: f32[4,128], index: 4, kind: input, shape index: {}]
  %s5 = inlined_call_operand.hbm [shape: f32[16,16], index: 5, kind: output, shape index: {}]
  %s6 = sld [smem:[#allocation0]]
  $region34: #{tpu_custom_call.1} parent=0
    _
  %s8 = ssub.s32 1, %s6
  %s9 = scalar_select 0, %s8, %s6
  $region1: #{tpu_custom_call.1} parent=0
    #allocation2 [shape = 'u8[131072]{0}', space=vmem, size = 0x20000, scoped, tag = 'input window, operand 2, single buffered']
    #allocation3 [shape = 's32[1]{0}', space=sflag, size = 0x4, scoped, tag = 'scoped memory for tpu_custom_call.1']
    #allocation4 [shape = 's32[1]{0}', space=sflag, size = 0x4, scoped, tag = 'scoped memory for tpu_custom_call.1']
    #allocation5 [shape = 'u8[8192]{0}', space=vmem, size = 0x2000, scoped, tag = 'output window, operand 0, single buffered']
    %10 = vsyncpa [#allocation3], 0
    %11 = vsyncpa [#allocation4], 0
    // Predicated region
    $region2: #{tpu_custom_call.1} parent=1 // pred_check
      _
    $region3: #{tpu_custom_call.1} parent=1 // pred_check_branch
      %13 = sbr.rel (0) target = $region5
    $region4: #{tpu_custom_call.1} parent=1 // pred_region
      _
    $region5: #{tpu_custom_call.1} parent=1 // pred_fallthru
      _
    // Predicated region
    $region6: #{tpu_custom_call.1} parent=1 // pred_check
      _
    $region7: #{tpu_custom_call.1} parent=1 // pred_check_branch
      %15 = sbr.rel (0) target = $region9
    $region8: #{tpu_custom_call.1} parent=1 // pred_region
      _
    $region9: #{tpu_custom_call.1} parent=1 // pred_fallthru
      _
    // Predicated region
    $region10: #{tpu_custom_call.1} parent=1 // pred_check
      _
    $region11: #{tpu_custom_call.1} parent=1 // pred_check_branch
      %17 = sbr.rel (0) target = $region13
    $region12: #{tpu_custom_call.1} parent=1 // pred_region
      %s19 = ssub.s32 4096, 4096
      %20 = vsyncadd [#allocation3], %s19
      %s21 = sshll.u32 [#allocation2], 4
      %s22 = int_to_ptr.vmem [resolvable:$true] %s21
      %27 = dma.hbm_to_vmem [thread:$0]  %s2, 4096, %s22, [#allocation3], 128, 128, 8
    $region13: #{tpu_custom_call.1} parent=1 // pred_fallthru
      _
    // Predicated region
    $region14: #{tpu_custom_call.1} parent=1 // pred_check
      _
    $region15: #{tpu_custom_call.1} parent=1 // pred_check_branch
      %29 = sbr.rel (0) target = $region17
    $region16: #{tpu_custom_call.1} parent=1 // pred_region
      _
    $region17: #{tpu_custom_call.1} parent=1 // pred_fallthru
      _
    // Predicated region
    $region18: #{tpu_custom_call.1} parent=1 // pred_check
      _
    $region19: #{tpu_custom_call.1} parent=1 // pred_check_branch
      %31 = sbr.rel (0) target = $region21
    $region20: #{tpu_custom_call.1} parent=1 // pred_region
      _
    $region21: #{tpu_custom_call.1} parent=1 // pred_fallthru
      _
    // Predicated region
    $region22: #{tpu_custom_call.1} parent=1 // pred_check
      _
    $region23: #{tpu_custom_call.1} parent=1 // pred_check_branch
      %33 = sbr.rel (0) target = $region25
    $region24: #{tpu_custom_call.1} parent=1 // pred_region
      %34 = dma.done [#allocation3], 4096
    $region25: #{tpu_custom_call.1} parent=1 // pred_fallthru
      _
    %v35 = vld [vmem:[%s0] sm:$0xff]
    %v36 = vld [vmem:[%s0 + $0x8] sm:$0xff]
    %v37 = vld [vmem:[%s1] sm:$0xff]
    %v38 = vld [vmem:[%s1 + $0x8] sm:$0xff]
    %v39 = vld [vmem:[%s1 + $0x10] sm:$0xff]
    %v40 = vld [vmem:[%s1 + $0x18] sm:$0xff]
    %v41 = vld [vmem:[%s4] sm:$0x1]
    %v42 = vlaneseq
    %v43 = vshrl.u32 %v42, 7
    %v44 = vsub.s32 0, %v43
    %v45 = vrot.slane %v41, %v44
    %vm46 = vcmask 261120
    %v48 = vsel %vm46, %v35, 0
    %v51 = vsel %vm46, %v36, 0
    %53 = vmatprep.subr.mxu0 0.0
    %54 = vmatpush1.msra.mxu0 %v37
    %55 = vmatprep.subr.mxu0 0.0
    %56 = vmatpush1.msra.mxu0 %v38
    %57 = vmatprep.subr.mxu0 0.0
    %58 = vmatpush1.msra.mxu0 %v39
    %59 = vmatprep.subr.mxu0 0.0
    %60 = vmatpush1.msra.mxu0 %v40
    %61 = vmatprep.subr.mxu0 0.0
    %62 = vmatpush1.msra.mxu0 0.0
    %63 = vmatprep.subr.mxu0 0.0
    %64 = vmatpush1.msra.mxu0 0.0
    %65 = vmatprep.subr.mxu0 0.0
    %66 = vmatpush1.msra.mxu0 0.0
    %67 = vmatprep.subr.mxu0 0.0
    %68 = vmatpush1.msra.mxu0 0.0
    %69 = vmatprep.subr.mxu0 0.0
    %70 = vmatpush1.msra.mxu0 0.0
    %71 = vmatprep.subr.mxu0 0.0
    %72 = vmatpush1.msra.mxu0 0.0
    %73 = vmatprep.subr.mxu0 0.0
    %74 = vmatpush1.msra.mxu0 0.0
    %75 = vmatprep.subr.mxu0 0.0
    %76 = vmatpush1.msra.mxu0 0.0
    %77 = vmatprep.subr.mxu0 0.0
    %78 = vmatpush1.msra.mxu0 0.0
    %79 = vmatprep.subr.mxu0 0.0
    %80 = vmatpush1.msra.mxu0 0.0
    %81 = vmatprep.subr.mxu0 0.0
    %82 = vmatpush1.msra.mxu0 0.0
    %83 = vmatprep.subr.mxu0 0.0
    %84 = vmatpush1.msra.mxu0 0.0
    %85 = vmatprep.subr.mxu0 0.0
    %86 = vmatpush1.msra.mxu0 0.0
    %87 = vmatprep.subr.mxu0 0.0
    %88 = vmatpush1.msra.mxu0 0.0
    %89 = vmatprep.subr.mxu0 0.0
    %90 = vmatpush1.msra.mxu0 0.0
    %91 = vmatprep.subr.mxu0 0.0
    %92 = vmatpush1.msra.mxu0 0.0
    %93 = vmatprep.subr.mxu0 0.0
    %94 = vmatpush1.msra.mxu0 0.0
    %95 = vmatprep.subr.mxu0 0.0
    %96 = vmatpush1.msra.mxu0 0.0
    %97 = vmatprep.subr.mxu0 0.0
    %98 = vmatpush1.msra.mxu0 0.0
    %99 = vmatprep.subr.mxu0 0.0
    %100 = vmatpush1.msra.mxu0 0.0
    %101 = vmatprep.subr.mxu0 0.0
    %102 = vmatpush1.msra.mxu0 0.0
    %103 = vmatprep.subr.mxu0 0.0
    %104 = vmatpush1.msra.mxu0 0.0
    %105 = vmatprep.subr.mxu0 0.0
    %106 = vmatpush1.msra.mxu0 0.0
    %107 = vmatprep.subr.mxu0 0.0
    %108 = vmatpush1.msra.mxu0 0.0
    %109 = vmatprep.subr.mxu0 0.0
    %110 = vmatpush1.msra.mxu0 0.0
    %111 = vmatprep.subr.mxu0 0.0
    %112 = vmatpush1.msra.mxu0 0.0
    %113 = vmatprep.subr.mxu0 0.0
    %114 = vmatpush1.msra.mxu0 0.0
    %115 = vmatprep.subr.mxu0 0.0
    %116 = vmatpush1.msra.mxu0 0.0
    %117 = vmatprep.mubr.f32.mxu0 0.0
    %118 = vmatmul.mubr.f32.gmra.mrb[0].mxu0 %v48
    %v119 = vpop.f32.mrb[0].mxu0
    %v120 = vadd.f32 %v45, %v119
    %v121 = vpop.f32.mrb[0].mxu0
    %122 = vmatprep.mubr.f32.mxu0 0.0
    %123 = vmatmul.mubr.f32.gmra.mrb[0].mxu0 %v51
    %v124 = vpop.f32.mrb[0].mxu0
    %v125 = vadd.f32 %v45, %v124
    %v126 = vpop.f32.mrb[0].mxu0
    %127 = vdwg.mxu0
    %v128 = vmax.f32 %v120, 0.0
    %v129 = vmax.f32 %v125, 0.0
    %v130 = vld [vmem:[#allocation2] sm:$0xff]
    %v131 = vld [vmem:[#allocation2 + $0x8] sm:$0xff]
    %v132 = vld [vmem:[#allocation2 + $0x10] sm:$0xff]
    %v133 = vld [vmem:[#allocation2 + $0x18] sm:$0xff]
    %v134 = vld [vmem:[#allocation2 + $0x20] sm:$0xff]
    %v135 = vld [vmem:[#allocation2 + $0x28] sm:$0xff]
    %v136 = vld [vmem:[#allocation2 + $0x30] sm:$0xff]
    %v137 = vld [vmem:[#allocation2 + $0x38] sm:$0xff]
    %v138 = vld [vmem:[#allocation2 + $0x40] sm:$0xff]
    %v139 = vld [vmem:[#allocation2 + $0x48] sm:$0xff]
    %v140 = vld [vmem:[#allocation2 + $0x50] sm:$0xff]
    %v141 = vld [vmem:[#allocation2 + $0x58] sm:$0xff]
    %v142 = vld [vmem:[#allocation2 + $0x60] sm:$0xff]
    %v143 = vld [vmem:[#allocation2 + $0x68] sm:$0xff]
    %v144 = vld [vmem:[#allocation2 + $0x70] sm:$0xff]
    %v145 = vld [vmem:[#allocation2 + $0x78] sm:$0xff]
    %v146 = vld [vmem:[%s4 + $0x1] sm:$0x1]
    %v147 = vlaneseq
    %v148 = vshrl.u32 %v147, 7
    %v149 = vsub.s32 0, %v148
    %v150 = vrot.slane %v146, %v149
    %151 = vmatprep.subr.mxu0 0.0
    %152 = vmatpush1.msra.mxu0 %v130
    %153 = vmatprep.subr.mxu0 0.0
    %154 = vmatpush1.msra.mxu0 %v131
    %155 = vmatprep.subr.mxu0 0.0
    %156 = vmatpush1.msra.mxu0 %v132
    %157 = vmatprep.subr.mxu0 0.0
    %158 = vmatpush1.msra.mxu0 %v133
    %159 = vmatprep.subr.mxu0 0.0
    %160 = vmatpush1.msra.mxu0 %v134
    %161 = vmatprep.subr.mxu0 0.0
    %162 = vmatpush1.msra.mxu0 %v135
    %163 = vmatprep.subr.mxu0 0.0
    %164 = vmatpush1.msra.mxu0 %v136
    %165 = vmatprep.subr.mxu0 0.0
    %166 = vmatpush1.msra.mxu0 %v137
    %167 = vmatprep.subr.mxu0 0.0
    %168 = vmatpush1.msra.mxu0 %v138
    %169 = vmatprep.subr.mxu0 0.0
    %170 = vmatpush1.msra.mxu0 %v139
    %171 = vmatprep.subr.mxu0 0.0
    %172 = vmatpush1.msra.mxu0 %v140
    %173 = vmatprep.subr.mxu0 0.0
    %174 = vmatpush1.msra.mxu0 %v141
    %175 = vmatprep.subr.mxu0 0.0
    %176 = vmatpush1.msra.mxu0 %v142
    %177 = vmatprep.subr.mxu0 0.0
    %178 = vmatpush1.msra.mxu0 %v143
    %179 = vmatprep.subr.mxu0 0.0
    %180 = vmatpush1.msra.mxu0 %v144
    %181 = vmatprep.subr.mxu0 0.0
    %182 = vmatpush1.msra.mxu0 %v145
    %183 = vmatprep.subr.mxu0 0.0
    %184 = vmatpush1.msra.mxu0 0.0
    %185 = vmatprep.subr.mxu0 0.0
    %186 = vmatpush1.msra.mxu0 0.0
    %187 = vmatprep.subr.mxu0 0.0
    %188 = vmatpush1.msra.mxu0 0.0
    %189 = vmatprep.subr.mxu0 0.0
    %190 = vmatpush1.msra.mxu0 0.0
    %191 = vmatprep.subr.mxu0 0.0
    %192 = vmatpush1.msra.mxu0 0.0
    %193 = vmatprep.subr.mxu0 0.0
    %194 = vmatpush1.msra.mxu0 0.0
    %195 = vmatprep.subr.mxu0 0.0
    %196 = vmatpush1.msra.mxu0 0.0
    %197 = vmatprep.subr.mxu0 0.0
    %198 = vmatpush1.msra.mxu0 0.0
    %199 = vmatprep.subr.mxu0 0.0
    %200 = vmatpush1.msra.mxu0 0.0
    %201 = vmatprep.subr.mxu0 0.0
    %202 = vmatpush1.msra.mxu0 0.0
    %203 = vmatprep.subr.mxu0 0.0
    %204 = vmatpush1.msra.mxu0 0.0
    %205 = vmatprep.subr.mxu0 0.0
    %206 = vmatpush1.msra.mxu0 0.0
    %207 = vmatprep.subr.mxu0 0.0
    %208 = vmatpush1.msra.mxu0 0.0
    %209 = vmatprep.subr.mxu0 0.0
    %210 = vmatpush1.msra.mxu0 0.0
    %211 = vmatprep.subr.mxu0 0.0
    %212 = vmatpush1.msra.mxu0 0.0
    %213 = vmatprep.subr.mxu0 0.0
    %214 = vmatpush1.msra.mxu0 0.0
    %215 = vmatprep.mubr.f32.mxu0 0.0
    %216 = vmatmul.mubr.f32.gmra.mrb[0].mxu0 %v128
    %v217 = vpop.f32.mrb[0].mxu0
    %v218 = vadd.f32 %v150, %v217
    %v219 = vpop.f32.mrb[0].mxu0
    %220 = vmatprep.mubr.f32.mxu0 0.0
    %221 = vmatmul.mubr.f32.gmra.mrb[0].mxu0 %v129
    %v222 = vpop.f32.mrb[0].mxu0
    %v223 = vadd.f32 %v150, %v222
    %v224 = vpop.f32.mrb[0].mxu0
    %225 = vdwg.mxu0
    %v226 = vmax.f32 %v218, 0.0
    %v227 = vmax.f32 %v223, 0.0
    %s228 = scalar_lea.vmem [#allocation2], 128
    %v229 = vld [vmem:[%s228] sm:$0xff]
    %v230 = vld [vmem:[%s228 + $0x8] sm:$0xff]
    %v231 = vld [vmem:[%s228 + $0x10] sm:$0xff]
    %v232 = vld [vmem:[%s228 + $0x18] sm:$0xff]
    %v233 = vld [vmem:[%s228 + $0x20] sm:$0xff]
    %v234 = vld [vmem:[%s228 + $0x28] sm:$0xff]
    %v235 = vld [vmem:[%s228 + $0x30] sm:$0xff]
    %v236 = vld [vmem:[%s228 + $0x38] sm:$0xff]
    %v237 = vld [vmem:[%s228 + $0x40] sm:$0xff]
    %v238 = vld [vmem:[%s228 + $0x48] sm:$0xff]
    %v239 = vld [vmem:[%s228 + $0x50] sm:$0xff]
    %v240 = vld [vmem:[%s228 + $0x58] sm:$0xff]
    %v241 = vld [vmem:[%s228 + $0x60] sm:$0xff]
    %v242 = vld [vmem:[%s228 + $0x68] sm:$0xff]
    %v243 = vld [vmem:[%s228 + $0x70] sm:$0xff]
    %v244 = vld [vmem:[%s228 + $0x78] sm:$0xff]
    %v245 = vld [vmem:[%s4 + $0x2] sm:$0x1]
    %v246 = vlaneseq
    %v247 = vshrl.u32 %v246, 7
    %v248 = vsub.s32 0, %v247
    %v249 = vrot.slane %v245, %v248
    %250 = vmatprep.subr.mxu0 0.0
    %251 = vmatpush1.msra.mxu0 %v229
    %252 = vmatprep.subr.mxu0 0.0
    %253 = vmatpush1.msra.mxu0 %v230
    %254 = vmatprep.subr.mxu0 0.0
    %255 = vmatpush1.msra.mxu0 %v231
    %256 = vmatprep.subr.mxu0 0.0
    %257 = vmatpush1.msra.mxu0 %v232
    %258 = vmatprep.subr.mxu0 0.0
    %259 = vmatpush1.msra.mxu0 %v233
    %260 = vmatprep.subr.mxu0 0.0
    %261 = vmatpush1.msra.mxu0 %v234
    %262 = vmatprep.subr.mxu0 0.0
    %263 = vmatpush1.msra.mxu0 %v235
    %264 = vmatprep.subr.mxu0 0.0
    %265 = vmatpush1.msra.mxu0 %v236
    %266 = vmatprep.subr.mxu0 0.0
    %267 = vmatpush1.msra.mxu0 %v237
    %268 = vmatprep.subr.mxu0 0.0
    %269 = vmatpush1.msra.mxu0 %v238
    %270 = vmatprep.subr.mxu0 0.0
    %271 = vmatpush1.msra.mxu0 %v239
    %272 = vmatprep.subr.mxu0 0.0
    %273 = vmatpush1.msra.mxu0 %v240
    %274 = vmatprep.subr.mxu0 0.0
    %275 = vmatpush1.msra.mxu0 %v241
    %276 = vmatprep.subr.mxu0 0.0
    %277 = vmatpush1.msra.mxu0 %v242
    %278 = vmatprep.subr.mxu0 0.0
    %279 = vmatpush1.msra.mxu0 %v243
    %280 = vmatprep.subr.mxu0 0.0
    %281 = vmatpush1.msra.mxu0 %v244
    %282 = vmatprep.subr.mxu0 0.0
    %283 = vmatpush1.msra.mxu0 0.0
    %284 = vmatprep.subr.mxu0 0.0
    %285 = vmatpush1.msra.mxu0 0.0
    %286 = vmatprep.subr.mxu0 0.0
    %287 = vmatpush1.msra.mxu0 0.0
    %288 = vmatprep.subr.mxu0 0.0
    %289 = vmatpush1.msra.mxu0 0.0
    %290 = vmatprep.subr.mxu0 0.0
    %291 = vmatpush1.msra.mxu0 0.0
    %292 = vmatprep.subr.mxu0 0.0
    %293 = vmatpush1.msra.mxu0 0.0
    %294 = vmatprep.subr.mxu0 0.0
    %295 = vmatpush1.msra.mxu0 0.0
    %296 = vmatprep.subr.mxu0 0.0
    %297 = vmatpush1.msra.mxu0 0.0
    %298 = vmatprep.subr.mxu0 0.0
    %299 = vmatpush1.msra.mxu0 0.0
    %300 = vmatprep.subr.mxu0 0.0
    %301 = vmatpush1.msra.mxu0 0.0
    %302 = vmatprep.subr.mxu0 0.0
    %303 = vmatpush1.msra.mxu0 0.0
    %304 = vmatprep.subr.mxu0 0.0
    %305 = vmatpush1.msra.mxu0 0.0
    %306 = vmatprep.subr.mxu0 0.0
    %307 = vmatpush1.msra.mxu0 0.0
    %308 = vmatprep.subr.mxu0 0.0
    %309 = vmatpush1.msra.mxu0 0.0
    %310 = vmatprep.subr.mxu0 0.0
    %311 = vmatpush1.msra.mxu0 0.0
    %312 = vmatprep.subr.mxu0 0.0
    %313 = vmatpush1.msra.mxu0 0.0
    %314 = vmatprep.mubr.f32.mxu0 0.0
    %315 = vmatmul.mubr.f32.gmra.mrb[0].mxu0 %v226
    %v316 = vpop.f32.mrb[0].mxu0
    %v317 = vadd.f32 %v249, %v316
    %v318 = vpop.f32.mrb[0].mxu0
    %319 = vmatprep.mubr.f32.mxu0 0.0
    %320 = vmatmul.mubr.f32.gmra.mrb[0].mxu0 %v227
    %v321 = vpop.f32.mrb[0].mxu0
    %v322 = vadd.f32 %v249, %v321
    %v323 = vpop.f32.mrb[0].mxu0
    %324 = vdwg.mxu0
    %v325 = vmax.f32 %v317, 0.0
    %v326 = vmax.f32 %v322, 0.0
    %v327 = vld [vmem:[%s3] sm:$0xff]
    %v328 = vld [vmem:[%s3 + $0x8] sm:$0xff]
    %v329 = vld [vmem:[%s3 + $0x10] sm:$0xff]
    %v330 = vld [vmem:[%s3 + $0x18] sm:$0xff]
    %v331 = vld [vmem:[%s3 + $0x20] sm:$0xff]
    %v332 = vld [vmem:[%s3 + $0x28] sm:$0xff]
    %v333 = vld [vmem:[%s3 + $0x30] sm:$0xff]
    %v334 = vld [vmem:[%s3 + $0x38] sm:$0xff]
    %v335 = vld [vmem:[%s3 + $0x40] sm:$0xff]
    %v336 = vld [vmem:[%s3 + $0x48] sm:$0xff]
    %v337 = vld [vmem:[%s3 + $0x50] sm:$0xff]
    %v338 = vld [vmem:[%s3 + $0x58] sm:$0xff]
    %v339 = vld [vmem:[%s3 + $0x60] sm:$0xff]
    %v340 = vld [vmem:[%s3 + $0x68] sm:$0xff]
    %v341 = vld [vmem:[%s3 + $0x70] sm:$0xff]
    %v342 = vld [vmem:[%s3 + $0x78] sm:$0xff]
    %v343 = vld [vmem:[%s4 + $0x3] sm:$0x1]
    %v344 = vlaneseq
    %v345 = vshrl.u32 %v344, 7
    %v346 = vsub.s32 0, %v345
    %v347 = vrot.slane %v343, %v346
    %348 = vmatprep.subr.mxu0 0.0
    %349 = vmatpush1.msra.mxu0 %v327
    %350 = vmatprep.subr.mxu0 0.0
    %351 = vmatpush1.msra.mxu0 %v328
    %352 = vmatprep.subr.mxu0 0.0
    %353 = vmatpush1.msra.mxu0 %v329
    %354 = vmatprep.subr.mxu0 0.0
    %355 = vmatpush1.msra.mxu0 %v330
    %356 = vmatprep.subr.mxu0 0.0
    %357 = vmatpush1.msra.mxu0 %v331
    %358 = vmatprep.subr.mxu0 0.0
    %359 = vmatpush1.msra.mxu0 %v332
    %360 = vmatprep.subr.mxu0 0.0
    %361 = vmatpush1.msra.mxu0 %v333
    %362 = vmatprep.subr.mxu0 0.0
    %363 = vmatpush1.msra.mxu0 %v334
    %364 = vmatprep.subr.mxu0 0.0
    %365 = vmatpush1.msra.mxu0 %v335
    %366 = vmatprep.subr.mxu0 0.0
    %367 = vmatpush1.msra.mxu0 %v336
    %368 = vmatprep.subr.mxu0 0.0
    %369 = vmatpush1.msra.mxu0 %v337
    %370 = vmatprep.subr.mxu0 0.0
    %371 = vmatpush1.msra.mxu0 %v338
    %372 = vmatprep.subr.mxu0 0.0
    %373 = vmatpush1.msra.mxu0 %v339
    %374 = vmatprep.subr.mxu0 0.0
    %375 = vmatpush1.msra.mxu0 %v340
    %376 = vmatprep.subr.mxu0 0.0
    %377 = vmatpush1.msra.mxu0 %v341
    %378 = vmatprep.subr.mxu0 0.0
    %379 = vmatpush1.msra.mxu0 %v342
    %380 = vmatprep.subr.mxu0 0.0
    %381 = vmatpush1.msra.mxu0 0.0
    %382 = vmatprep.subr.mxu0 0.0
    %383 = vmatpush1.msra.mxu0 0.0
    %384 = vmatprep.subr.mxu0 0.0
    %385 = vmatpush1.msra.mxu0 0.0
    %386 = vmatprep.subr.mxu0 0.0
    %387 = vmatpush1.msra.mxu0 0.0
    %388 = vmatprep.subr.mxu0 0.0
    %389 = vmatpush1.msra.mxu0 0.0
    %390 = vmatprep.subr.mxu0 0.0
    %391 = vmatpush1.msra.mxu0 0.0
    %392 = vmatprep.subr.mxu0 0.0
    %393 = vmatpush1.msra.mxu0 0.0
    %394 = vmatprep.subr.mxu0 0.0
    %395 = vmatpush1.msra.mxu0 0.0
    %396 = vmatprep.subr.mxu0 0.0
    %397 = vmatpush1.msra.mxu0 0.0
    %398 = vmatprep.subr.mxu0 0.0
    %399 = vmatpush1.msra.mxu0 0.0
    %400 = vmatprep.subr.mxu0 0.0
    %401 = vmatpush1.msra.mxu0 0.0
    %402 = vmatprep.subr.mxu0 0.0
    %403 = vmatpush1.msra.mxu0 0.0
    %404 = vmatprep.subr.mxu0 0.0
    %405 = vmatpush1.msra.mxu0 0.0
    %406 = vmatprep.subr.mxu0 0.0
    %407 = vmatpush1.msra.mxu0 0.0
    %408 = vmatprep.subr.mxu0 0.0
    %409 = vmatpush1.msra.mxu0 0.0
    %410 = vmatprep.subr.mxu0 0.0
    %411 = vmatpush1.msra.mxu0 0.0
    %412 = vmatprep.mubr.f32.mxu0 0.0
    %413 = vmatmul.mubr.f32.gmra.mrb[0].mxu0 %v325
    %v414 = vpop.f32.mrb[0].mxu0
    %v415 = vadd.f32 %v347, %v414
    %v416 = vpop.f32.mrb[0].mxu0
    %417 = vmatprep.mubr.f32.mxu0 0.0
    %418 = vmatmul.mubr.f32.gmra.mrb[0].mxu0 %v326
    %v419 = vpop.f32.mrb[0].mxu0
    %v420 = vadd.f32 %v347, %v419
    %v421 = vpop.f32.mrb[0].mxu0
    %422 = vdwg.mxu0
    %vm423 = vcmask 130048
    %424 = vst.msk [vmem:[#allocation5] sm:$0xff] %vm423, %v415
    %425 = vst.msk [vmem:[#allocation5 + $0x8] sm:$0xff] %vm423, %v420
    // Predicated region
    $region26: #{tpu_custom_call.1} parent=1 // pred_check
      _
    $region27: #{tpu_custom_call.1} parent=1 // pred_check_branch
      %427 = sbr.rel (0) target = $region29
    $region28: #{tpu_custom_call.1} parent=1 // pred_region
      %s429 = ssub.s32 256, 256
      %430 = vsyncadd [#allocation4], %s429
      %s431 = sshll.u32 [#allocation5], 4
      %s432 = int_to_ptr.vmem [resolvable:$true] %s431
      %437 = dma.vmem_to_hbm [thread:$0]  %s432, 256, %s5, [#allocation4], 128, 128, 8
    $region29: #{tpu_custom_call.1} parent=1 // pred_fallthru
      _
    // Predicated region
    $region30: #{tpu_custom_call.1} parent=1 // pred_check
      _
    $region31: #{tpu_custom_call.1} parent=1 // pred_check_branch
      %439 = sbr.rel (0) target = $region33
    $region32: #{tpu_custom_call.1} parent=1 // pred_region
      %440 = dma.done [#allocation4], 256
    $region33: #{tpu_custom_call.1} parent=1 // pred_fallthru
      _
    %441 = vsyncpa [#allocation3], 1
    %442 = vsyncpa [#allocation4], 1

</llo_original>
